<compile_context>
chip_gen: v7x
topology: tpu7x:2x2x1
jax: 0.10.0
libtpu: 0.0.40
codegen_flags: <defaults>
</compile_context>

<pallas_src>
import jax
import jax.numpy as jnp
from jax.experimental import pallas as pl
from jax.experimental.pallas import tpu as pltpu

IN_DIM = 28 * 28       # 784
HID = 128
OUT_DIM = 10
OUT_PAD = 128          # lane-dense output block; slice [:, :10] in the wrapper
MAX_TILE_N = 1024      # large batch tiles amortize per-step pipeline overhead


def _mlp_kernel(x_ref, w1_ref, b1_ref, w2_ref, b2_ref, w3_ref, b3_ref, o_ref):
    # x arrives as f32 straight from HBM; cast to bf16 in-kernel (free under DMA bound).
    x_bf = x_ref[...].astype(jnp.bfloat16)
    # fc1 + relu (bf16 operands, f32 MXU accumulation)
    h1 = jnp.dot(x_bf, w1_ref[...], preferred_element_type=jnp.float32)
    h1 = jnp.maximum(h1 + b1_ref[...], 0.0)
    # fc2 + relu
    h2 = jnp.dot(h1.astype(jnp.bfloat16), w2_ref[...],
                 preferred_element_type=jnp.float32)
    h2 = jnp.maximum(h2 + b2_ref[...], 0.0)
    # fc3 (no activation); 128-lane padded output, stored as bf16 (unmasked vst)
    out = jnp.dot(h2.astype(jnp.bfloat16), w3_ref[...],
                  preferred_element_type=jnp.float32)
    o_ref[...] = (out + b3_ref[...]).astype(o_ref.dtype)


def _round_up(x, m):
    return ((x + m - 1) // m) * m


def prepare_params(params):
    """One-time device-layout prep (hoisted out of the per-call path):
    bf16 weights (in, out), f32 biases (1, out), fc3 padded to 128 output lanes."""
    w1, b1, w2, b2, w3, b3 = params
    w1_bf = w1.astype(jnp.bfloat16)
    w2_bf = w2.astype(jnp.bfloat16)
    w3_p = jnp.zeros((HID, OUT_PAD), jnp.bfloat16).at[:, :OUT_DIM].set(
        w3.astype(jnp.bfloat16))
    b1_f = b1.reshape(1, HID).astype(jnp.float32)
    b2_f = b2.reshape(1, HID).astype(jnp.float32)
    b3_p = jnp.zeros((1, OUT_PAD), jnp.float32).at[:, :OUT_DIM].set(
        b3.reshape(1, OUT_DIM).astype(jnp.float32))
    return (w1_bf, b1_f, w2_bf, b2_f, w3_p, b3_p)


def feed_forward_nn(x, prepared_params):
    """x: any shape flattening to (N, 784), mirrors PyTorch x.view(-1, 28*28).
    prepared_params: output of prepare_params().  Returns (N, 10) float32 logits."""
    w1_bf, b1_f, w2_bf, b2_f, w3_p, b3_p = prepared_params
    x2d = x.reshape(-1, IN_DIM).astype(jnp.float32)
    n = x2d.shape[0]
    if n == 0:
        return jnp.zeros((0, OUT_DIM), jnp.float32)

    # Batch tile: multiple of 8 (f32 sublane).  For n > 16 ensure >= 2 grid steps so
    # the "parallel" batch axis can shard across v7x's two TensorCores.
    if n > 16:
        tile_n = min(MAX_TILE_N, _round_up(-(-n // 2), 16))
    else:
        tile_n = _round_up(n, 8)
    n_tiles = pl.cdiv(n, tile_n)

    # VMEM budget: double-buffered f32 x tiles + bf16 out tiles, resident weights,
    # in-kernel bf16/f32 temps; 2x headroom, capped at 32 MiB (v7x per-TC safe).
    weight_bytes = (IN_DIM * HID + HID * HID + HID * OUT_PAD) * 2 \
        + (2 * HID + OUT_PAD) * 4
    vmem_bytes = (2 * tile_n * IN_DIM * 4      # double-buffered f32 x tiles
                  + tile_n * IN_DIM * 2        # in-kernel bf16 copy of x
                  + 2 * tile_n * OUT_PAD * 2   # double-buffered bf16 out tiles
                  + 2 * weight_bytes           # resident (double-buffered) weights
                  + 3 * tile_n * HID * 4)      # f32 h1/h2 temps
    vmem_limit = int(min(max(2 * vmem_bytes, 8 << 20), 32 << 20))

    n_work = n_tiles * tile_n
    flops = 2 * n_work * (IN_DIM * HID + HID * HID + HID * OUT_PAD)
    bytes_accessed = n * IN_DIM * 4 + n * OUT_PAD * 2 + weight_bytes
    cost = pl.CostEstimate(flops=flops, transcendentals=0,
                           bytes_accessed=bytes_accessed)

    out = pl.pallas_call(
        _mlp_kernel,
        out_shape=jax.ShapeDtypeStruct((n, OUT_PAD), jnp.bfloat16),
        grid=(n_tiles,),
        in_specs=[
            pl.BlockSpec((tile_n, IN_DIM), lambda i: (i, 0)),   # x: tiled over batch (f32)
            pl.BlockSpec((IN_DIM, HID), lambda i: (0, 0)),      # w1: resident
            pl.BlockSpec((1, HID), lambda i: (0, 0)),           # b1: resident
            pl.BlockSpec((HID, HID), lambda i: (0, 0)),         # w2: resident
            pl.BlockSpec((1, HID), lambda i: (0, 0)),           # b2: resident
            pl.BlockSpec((HID, OUT_PAD), lambda i: (0, 0)),     # w3: resident
            pl.BlockSpec((1, OUT_PAD), lambda i: (0, 0)),       # b3: resident
        ],
        out_specs=pl.BlockSpec((tile_n, OUT_PAD), lambda i: (i, 0)),
        compiler_params=pltpu.CompilerParams(
            dimension_semantics=("parallel",),   # megacore sharding on v7x
            vmem_limit_bytes=vmem_limit),
        cost_estimate=cost,
    )(x2d, w1_bf, b1_f, w2_bf, b2_f, w3_p, b3_p)

    # Partial last block rows (if any) are OOB writes and are discarded by Pallas;
    # only the padded 10->128 lanes need slicing here.
    return out[:, :OUT_DIM].astype(jnp.float32)


def init_params(key):
    """Deterministic init mimicking nn.Linear's U(-1/sqrt(fan_in), 1/sqrt(fan_in)).
    Weights stored as (in_features, out_features)."""
    ks = jax.random.split(key, 6)

    def linear(kw, kb, fan_in, fan_out):
        bound = 1.0 / jnp.sqrt(fan_in)
        w = jax.random.uniform(kw, (fan_in, fan_out), jnp.float32, -bound, bound)
        b = jax.random.uniform(kb, (1, fan_out), jnp.float32, -bound, bound)
        return w, b

    w1, b1 = linear(ks[0], ks[1], IN_DIM, HID)
    w2, b2 = linear(ks[2], ks[3], HID, HID)
    w3, b3 = linear(ks[4], ks[5], HID, OUT_DIM)
    return (w1, b1, w2, b2, w3, b3)


def _reference(x, params):
    """Pure-JAX reference reproducing the kernel's bf16-input / f32-accumulate /
    bf16-output numerics."""
    w1, b1, w2, b2, w3, b3 = params
    x2d = x.reshape(-1, IN_DIM).astype(jnp.float32)
    bf = lambda a: a.astype(jnp.bfloat16).astype(jnp.float32)
    h1 = jnp.maximum(bf(x2d) @ bf(w1) + b1, 0.0)
    h2 = jnp.maximum(bf(h1) @ bf(w2) + b2, 0.0)
    out = bf(h2) @ bf(w3) + b3
    return out.astype(jnp.bfloat16).astype(jnp.float32)


if __name__ == "__main__":
    key = jax.random.PRNGKey(0)
    k_param, k_x = jax.random.split(key)
    params = init_params(k_param)
    prepared = prepare_params(params)

    # Small MNIST-like NCHW input: batch=2, channels=1, 28x28
    x = jax.random.normal(k_x, (2, 1, 28, 28), dtype=jnp.float32)

    out = feed_forward_nn(x, prepared)
    out = jax.block_until_ready(out)

    ref = _reference(x, params)
    assert out.shape == (2, 10), out.shape
    assert jnp.allclose(out, ref, atol=2e-2, rtol=2e-2), "mismatch vs reference"

    print("KERNEL_OK")
</pallas_src>

<mosaic_0001>
module attributes {stable_mosaic.version = 11 : i64} {
  func.func @_mlp_kernel(%arg0: i32, %arg1: memref<8x784xf32, #tpu.memory_space<vmem>>, %arg2: memref<784x128xbf16, #tpu.memory_space<vmem>>, %arg3: memref<1x128xf32, #tpu.memory_space<vmem>>, %arg4: memref<128x128xbf16, #tpu.memory_space<vmem>>, %arg5: memref<1x128xf32, #tpu.memory_space<vmem>>, %arg6: memref<128x128xbf16, #tpu.memory_space<vmem>>, %arg7: memref<1x128xf32, #tpu.memory_space<vmem>>, %arg8: memref<8x128xbf16, #tpu.memory_space<vmem>>) attributes {dimension_semantics = [#tpu.dimension_semantics<parallel>], iteration_bounds = array<i64: 1>, scalar_prefetch = 0 : i64, scratch_operands = 0 : i64, tpu.core_type = #tpu.core_type<tc>, window_params = [{transform_indices = @transform_0, window_bounds = array<i64: 8, 784>}, {pipeline_mode = #tpu.pipeline_mode<synchronous>, transform_indices = @transform_1, window_bounds = array<i64: 784, 128>}, {pipeline_mode = #tpu.pipeline_mode<synchronous>, transform_indices = @transform_2, window_bounds = array<i64: 1, 128>}, {pipeline_mode = #tpu.pipeline_mode<synchronous>, transform_indices = @transform_3, window_bounds = array<i64: 128, 128>}, {pipeline_mode = #tpu.pipeline_mode<synchronous>, transform_indices = @transform_4, window_bounds = array<i64: 1, 128>}, {pipeline_mode = #tpu.pipeline_mode<synchronous>, transform_indices = @transform_5, window_bounds = array<i64: 128, 128>}, {pipeline_mode = #tpu.pipeline_mode<synchronous>, transform_indices = @transform_6, window_bounds = array<i64: 1, 128>}, {transform_indices = @transform_7, window_bounds = array<i64: 8, 128>}]} {
    %c0 = arith.constant 0 : index
    %c0_0 = arith.constant 0 : index
    %0 = vector.load %arg1[%c0, %c0_0] : memref<8x784xf32, #tpu.memory_space<vmem>>, vector<8x784xf32>
    %1 = arith.truncf %0 : vector<8x784xf32> to vector<8x784xbf16>
    %c0_1 = arith.constant 0 : index
    %c0_2 = arith.constant 0 : index
    %2 = vector.load %arg2[%c0_1, %c0_2] : memref<784x128xbf16, #tpu.memory_space<vmem>>, vector<784x128xbf16>
    %cst = arith.constant dense<0.000000e+00> : vector<8x128xf32>
    %3 = tpu.matmul %1, %2, %cst {dimension_numbers = #tpu.dot_dimension_numbers<[1], [0], [0], [1], [0, 0, 1, 1], [], []>} : vector<8x784xbf16>, vector<784x128xbf16>, vector<8x128xf32> -> vector<8x128xf32>
    %c0_3 = arith.constant 0 : index
    %c0_4 = arith.constant 0 : index
    %4 = vector.load %arg3[%c0_3, %c0_4] : memref<1x128xf32, #tpu.memory_space<vmem>>, vector<1x128xf32>
    %5 = vector.broadcast %4 : vector<1x128xf32> to vector<8x128xf32>
    %6 = arith.addf %3, %5 : vector<8x128xf32>
    %cst_5 = arith.constant 0.000000e+00 : f32
    %7 = vector.broadcast %cst_5 : f32 to vector<8x128xf32>
    %8 = arith.maximumf %6, %7 : vector<8x128xf32>
    %9 = arith.truncf %8 : vector<8x128xf32> to vector<8x128xbf16>
    %c0_6 = arith.constant 0 : index
    %c0_7 = arith.constant 0 : index
    %10 = vector.load %arg4[%c0_6, %c0_7] : memref<128x128xbf16, #tpu.memory_space<vmem>>, vector<128x128xbf16>
    %cst_8 = arith.constant dense<0.000000e+00> : vector<8x128xf32>
    %11 = tpu.matmul %9, %10, %cst_8 {dimension_numbers = #tpu.dot_dimension_numbers<[1], [0], [0], [1], [0, 0, 1, 1], [], []>} : vector<8x128xbf16>, vector<128x128xbf16>, vector<8x128xf32> -> vector<8x128xf32>
    %c0_9 = arith.constant 0 : index
    %c0_10 = arith.constant 0 : index
    %12 = vector.load %arg5[%c0_9, %c0_10] : memref<1x128xf32, #tpu.memory_space<vmem>>, vector<1x128xf32>
    %13 = vector.broadcast %12 : vector<1x128xf32> to vector<8x128xf32>
    %14 = arith.addf %11, %13 : vector<8x128xf32>
    %cst_11 = arith.constant 0.000000e+00 : f32
    %15 = vector.broadcast %cst_11 : f32 to vector<8x128xf32>
    %16 = arith.maximumf %14, %15 : vector<8x128xf32>
    %17 = arith.truncf %16 : vector<8x128xf32> to vector<8x128xbf16>
    %c0_12 = arith.constant 0 : index
    %c0_13 = arith.constant 0 : index
    %18 = vector.load %arg6[%c0_12, %c0_13] : memref<128x128xbf16, #tpu.memory_space<vmem>>, vector<128x128xbf16>
    %cst_14 = arith.constant dense<0.000000e+00> : vector<8x128xf32>
    %19 = tpu.matmul %17, %18, %cst_14 {dimension_numbers = #tpu.dot_dimension_numbers<[1], [0], [0], [1], [0, 0, 1, 1], [], []>} : vector<8x128xbf16>, vector<128x128xbf16>, vector<8x128xf32> -> vector<8x128xf32>
    %c0_15 = arith.constant 0 : index
    %c0_16 = arith.constant 0 : index
    %20 = vector.load %arg7[%c0_15, %c0_16] : memref<1x128xf32, #tpu.memory_space<vmem>>, vector<1x128xf32>
    %21 = vector.broadcast %20 : vector<1x128xf32> to vector<8x128xf32>
    %22 = arith.addf %19, %21 : vector<8x128xf32>
    %23 = arith.truncf %22 : vector<8x128xf32> to vector<8x128xbf16>
    %c0_17 = arith.constant 0 : index
    %c0_18 = arith.constant 0 : index
    %24 = vector.load %arg8[%c0_17, %c0_18] : memref<8x128xbf16, #tpu.memory_space<vmem>>, vector<8x128xbf16>
    tpu.vector_store %arg8[%c0_17, %c0_18], %23 {strides = array<i32>} : memref<8x128xbf16, #tpu.memory_space<vmem>>, vector<8x128xbf16>,
    return
  }
  func.func @transform_0(%arg0: i32) -> (i32, i32) {
    %c0_i32 = arith.constant 0 : i32
    %c0_i32_0 = arith.constant 0 : i32
    return %arg0, %c0_i32 : i32, i32
  }
  func.func @transform_1(%arg0: i32) -> (i32, i32) {
    %c0_i32 = arith.constant 0 : i32
    %c0_i32_0 = arith.constant 0 : i32
    %c0_i32_1 = arith.constant 0 : i32
    return %c0_i32, %c0_i32_0 : i32, i32
  }
  func.func @transform_2(%arg0: i32) -> (i32, i32) {
    %c0_i32 = arith.constant 0 : i32
    %c0_i32_0 = arith.constant 0 : i32
    %c0_i32_1 = arith.constant 0 : i32
    return %c0_i32, %c0_i32_0 : i32, i32
  }
  func.func @transform_3(%arg0: i32) -> (i32, i32) {
    %c0_i32 = arith.constant 0 : i32
    %c0_i32_0 = arith.constant 0 : i32
    %c0_i32_1 = arith.constant 0 : i32
    return %c0_i32, %c0_i32_0 : i32, i32
  }
  func.func @transform_4(%arg0: i32) -> (i32, i32) {
    %c0_i32 = arith.constant 0 : i32
    %c0_i32_0 = arith.constant 0 : i32
    %c0_i32_1 = arith.constant 0 : i32
    return %c0_i32, %c0_i32_0 : i32, i32
  }
  func.func @transform_5(%arg0: i32) -> (i32, i32) {
    %c0_i32 = arith.constant 0 : i32
    %c0_i32_0 = arith.constant 0 : i32
    %c0_i32_1 = arith.constant 0 : i32
    return %c0_i32, %c0_i32_0 : i32, i32
  }
  func.func @transform_6(%arg0: i32) -> (i32, i32) {
    %c0_i32 = arith.constant 0 : i32
    %c0_i32_0 = arith.constant 0 : i32
    %c0_i32_1 = arith.constant 0 : i32
    return %c0_i32, %c0_i32_0 : i32, i32
  }
  func.func @transform_7(%arg0: i32) -> (i32, i32) {
    %c0_i32 = arith.constant 0 : i32
    %c0_i32_0 = arith.constant 0 : i32
    return %arg0, %c0_i32 : i32, i32
  }
}

</mosaic_0001>

<llo_original>
// kernel: tpu_custom_call.1
$region0: #{tpu_custom_call.1}
  #allocation0 [shape = 'u32[]', space=smem, size = 0x4, offset = 0x4, fixed_abs, tag = 'smem constant byte address 0x4 - core index']
  #allocation1 [shape = 'u32[144,128]{1,0:T(1,128)}', space=vmem, size = 0x12000, scoped, tag = 'internal scratch']
  %s0 = inlined_call_operand.hbm [shape: f32[2,784], index: 0, kind: input, shape index: {}]
  %s1 = inlined_call_operand.hbm [shape: bf16[784,128], index: 1, kind: input, shape index: {}]
  %s2 = inlined_call_operand.vmem [shape: f32[1,128], index: 2, kind: input, shape index: {}]
  %s3 = inlined_call_operand.hbm [shape: bf16[128,128], index: 3, kind: input, shape index: {}]
  %s4 = inlined_call_operand.vmem [shape: f32[1,128], index: 4, kind: input, shape index: {}]
  %s5 = inlined_call_operand.hbm [shape: bf16[128,128], index: 5, kind: input, shape index: {}]
  %s6 = inlined_call_operand.vmem [shape: f32[1,128], index: 6, kind: input, shape index: {}]
  %s7 = inlined_call_operand.hbm [shape: bf16[2,128], index: 7, kind: output, shape index: {}]
  %s8 = sld [smem:[#allocation0]]
  $region54: #{tpu_custom_call.1} parent=0
    _
  %s10 = ssub.s32 1, %s8
  %s11 = scalar_select 0, %s10, %s8
  $region1: #{tpu_custom_call.1} parent=0
    #allocation2 [shape = 'u8[28672]{0}', space=vmem, size = 0x7000, scoped, tag = 'input window, operand 0, single buffered']
    #allocation3 [shape = 's32[1]{0}', space=sflag, size = 0x4, scoped, tag = 'scoped memory for tpu_custom_call.1']
    #allocation4 [shape = 's32[1]{0}', space=sflag, size = 0x4, scoped, tag = 'scoped memory for tpu_custom_call.1']
    #allocation5 [shape = 'u8[200704]{0}', space=vmem, size = 0x31000, scoped, tag = 'input window, operand 1, single buffered']
    #allocation6 [shape = 's32[1]{0}', space=sflag, size = 0x4, scoped, tag = 'scoped memory for tpu_custom_call.1']
    #allocation7 [shape = 'u8[32768]{0}', space=vmem, size = 0x8000, scoped, tag = 'input window, operand 3, single buffered']
    #allocation8 [shape = 'u8[32768]{0}', space=vmem, size = 0x8000, scoped, tag = 'input window, operand 5, single buffered']
    #allocation9 [shape = 's32[1]{0}', space=sflag, size = 0x4, scoped, tag = 'scoped memory for tpu_custom_call.1']
    #allocation10 [shape = 'u8[2048]{0}', space=vmem, size = 0x800, scoped, tag = 'output window, operand 0, single buffered']
    %12 = vsyncpa [#allocation3], 0
    %13 = vsyncpa [#allocation6], 0
    %14 = vsyncpa [#allocation9], 0
    %15 = vsyncpa [#allocation4], 0
    // Predicated region
    $region2: #{tpu_custom_call.1} parent=1 // pred_check
      _
    $region3: #{tpu_custom_call.1} parent=1 // pred_check_branch
      %17 = sbr.rel (0) target = $region5
    $region4: #{tpu_custom_call.1} parent=1 // pred_region
      %s19 = ssub.s32 896, 224
      %20 = vsyncadd [#allocation3], %s19
      %s21 = sshll.u32 [#allocation2], 4
      %s22 = int_to_ptr.vmem [resolvable:$true] %s21
      %27 = dma.hbm_to_vmem [thread:$0]  %s0, 224, %s22, [#allocation3], 224, 224, 14
    $region5: #{tpu_custom_call.1} parent=1 // pred_fallthru
      _
    // Predicated region
    $region6: #{tpu_custom_call.1} parent=1 // pred_check
      _
    $region7: #{tpu_custom_call.1} parent=1 // pred_check_branch
      %29 = sbr.rel (0) target = $region9
    $region8: #{tpu_custom_call.1} parent=1 // pred_region
      %s31 = ssub.s32 6272, 6272
      %32 = vsyncadd [#allocation6], %s31
      %s33 = sshll.u32 [#allocation5], 4
      %s34 = int_to_ptr.vmem [resolvable:$true] %s33
      %39 = dma.hbm_to_vmem [thread:$0]  %s1, 6272, %s34, [#allocation6], 64, 64, 4
    $region9: #{tpu_custom_call.1} parent=1 // pred_fallthru
      _
    // Predicated region
    $region10: #{tpu_custom_call.1} parent=1 // pred_check
      _
    $region11: #{tpu_custom_call.1} parent=1 // pred_check_branch
      %41 = sbr.rel (0) target = $region13
    $region12: #{tpu_custom_call.1} parent=1 // pred_region
      _
    $region13: #{tpu_custom_call.1} parent=1 // pred_fallthru
      _
    // Predicated region
    $region14: #{tpu_custom_call.1} parent=1 // pred_check
      _
    $region15: #{tpu_custom_call.1} parent=1 // pred_check_branch
      %43 = sbr.rel (0) target = $region17
    $region16: #{tpu_custom_call.1} parent=1 // pred_region
      %s45 = ssub.s32 1024, 1024
      %46 = vsyncadd [#allocation6], %s45
      %s47 = sshll.u32 [#allocation7], 4
      %s48 = int_to_ptr.vmem [resolvable:$true] %s47
      %53 = dma.hbm_to_vmem [thread:$0]  %s3, 1024, %s48, [#allocation6], 64, 64, 4
    $region17: #{tpu_custom_call.1} parent=1 // pred_fallthru
      _
    // Predicated region
    $region18: #{tpu_custom_call.1} parent=1 // pred_check
      _
    $region19: #{tpu_custom_call.1} parent=1 // pred_check_branch
      %55 = sbr.rel (0) target = $region21
    $region20: #{tpu_custom_call.1} parent=1 // pred_region
      _
    $region21: #{tpu_custom_call.1} parent=1 // pred_fallthru
      _
    // Predicated region
    $region22: #{tpu_custom_call.1} parent=1 // pred_check
      _
    $region23: #{tpu_custom_call.1} parent=1 // pred_check_branch
      %57 = sbr.rel (0) target = $region25
    $region24: #{tpu_custom_call.1} parent=1 // pred_region
      %s59 = ssub.s32 1024, 1024
      %60 = vsyncadd [#allocation9], %s59
      %s61 = sshll.u32 [#allocation8], 4
      %s62 = int_to_ptr.vmem [resolvable:$true] %s61
      %67 = dma.hbm_to_vmem [thread:$0]  %s5, 1024, %s62, [#allocation9], 64, 64, 4
    $region25: #{tpu_custom_call.1} parent=1 // pred_fallthru
      _
    // Predicated region
    $region26: #{tpu_custom_call.1} parent=1 // pred_check
      _
    $region27: #{tpu_custom_call.1} parent=1 // pred_check_branch
      %69 = sbr.rel (0) target = $region29
    $region28: #{tpu_custom_call.1} parent=1 // pred_region
      _
    $region29: #{tpu_custom_call.1} parent=1 // pred_fallthru
      _
    // Predicated region
    $region30: #{tpu_custom_call.1} parent=1 // pred_check
      _
    $region31: #{tpu_custom_call.1} parent=1 // pred_check_branch
      %71 = sbr.rel (0) target = $region33
    $region32: #{tpu_custom_call.1} parent=1 // pred_region
      %72 = dma.done [#allocation3], 896
    $region33: #{tpu_custom_call.1} parent=1 // pred_fallthru
      _
    // Predicated region
    $region34: #{tpu_custom_call.1} parent=1 // pred_check
      _
    $region35: #{tpu_custom_call.1} parent=1 // pred_check_branch
      %74 = sbr.rel (0) target = $region37
    $region36: #{tpu_custom_call.1} parent=1 // pred_region
      %75 = dma.done [#allocation6], 6272
    $region37: #{tpu_custom_call.1} parent=1 // pred_fallthru
      _
    // Predicated region
    $region38: #{tpu_custom_call.1} parent=1 // pred_check
      _
    $region39: #{tpu_custom_call.1} parent=1 // pred_check_branch
      %77 = sbr.rel (0) target = $region41
    $region40: #{tpu_custom_call.1} parent=1 // pred_region
      %78 = dma.done [#allocation6], 1024
    $region41: #{tpu_custom_call.1} parent=1 // pred_fallthru
      _
    // Predicated region
    $region42: #{tpu_custom_call.1} parent=1 // pred_check
      _
    $region43: #{tpu_custom_call.1} parent=1 // pred_check_branch
      %80 = sbr.rel (0) target = $region45
    $region44: #{tpu_custom_call.1} parent=1 // pred_region
      %81 = dma.done [#allocation9], 1024
    $region45: #{tpu_custom_call.1} parent=1 // pred_fallthru
      _
    %v83 = vld [vmem:[#allocation2] sm:$0xff]
    %v84 = vld [vmem:[#allocation2 + $0x8] sm:$0x3f]
    %v85 = vld [vmem:[#allocation2 + $0xe] sm:$0xff]
    %v86 = vld [vmem:[#allocation2 + $0x16] sm:$0x3f]
    %v87 = vld [vmem:[#allocation2 + $0x1c] sm:$0xff]
    %v88 = vld [vmem:[#allocation2 + $0x24] sm:$0x3f]
    %v89 = vld [vmem:[#allocation2 + $0x2a] sm:$0xff]
    %v90 = vld [vmem:[#allocation2 + $0x32] sm:$0x3f]
    %v99 = vcombine.low %v83, %v85
    %v100 = vcombine.high %v83, %v85
    %v101 = vcombine.low %v87, %v89
    %v102 = vcombine.high %v87, %v89
    %v104 = vunpack.c.l.s4 1983009808
    %v105 = vunpack.c.0.s8 %v104
    %v106 = vlaneseq
    %v107 = vshrl.u32 %v106, 7
    %v108 = vsub.s32 %v105, %v107
    %v109 = vrot.slane %v99, %v108
    %v111 = vunpack.c.l.s4 1983009808
    %v112 = vunpack.c.0.s8 %v111
    %v113 = vlaneseq
    %v114 = vshrl.u32 %v113, 7
    %v115 = vsub.s32 %v112, %v114
    %v116 = vrot.slane %v100, %v115
    %v118 = vunpack.c.l.s4 1983009808
    %v119 = vunpack.c.0.s8 %v118
    %v120 = vlaneseq
    %v121 = vshrl.u32 %v120, 7
    %v122 = vsub.s32 %v119, %v121
    %v123 = vrot.slane %v101, %v122
    %v125 = vunpack.c.l.s4 1983009808
    %v126 = vunpack.c.0.s8 %v125
    %v127 = vlaneseq
    %v128 = vshrl.u32 %v127, 7
    %v129 = vsub.s32 %v126, %v128
    %v130 = vrot.slane %v102, %v129
    %v131 = vcombine.low %v109, %v123
    %v132 = vcombine.high %v109, %v123
    %v133 = vcombine.low %v116, %v130
    %v134 = vcombine.high %v116, %v130
    %v135 = vcombine.low %v84, %v86
    %v136 = vcombine.high %v84, %v86
    %v137 = vcombine.low %v88, %v90
    %v138 = vcombine.high %v88, %v90
    %v140 = vunpack.c.l.s4 1983009808
    %v141 = vunpack.c.0.s8 %v140
    %v142 = vlaneseq
    %v143 = vshrl.u32 %v142, 7
    %v144 = vsub.s32 %v141, %v143
    %v145 = vrot.slane %v135, %v144
    %v147 = vunpack.c.l.s4 1983009808
    %v148 = vunpack.c.0.s8 %v147
    %v149 = vlaneseq
    %v150 = vshrl.u32 %v149, 7
    %v151 = vsub.s32 %v148, %v150
    %v152 = vrot.slane %v136, %v151
    %v154 = vunpack.c.l.s4 1983009808
    %v155 = vunpack.c.0.s8 %v154
    %v156 = vlaneseq
    %v157 = vshrl.u32 %v156, 7
    %v158 = vsub.s32 %v155, %v157
    %v159 = vrot.slane %v137, %v158
    %v161 = vunpack.c.l.s4 1983009808
    %v162 = vunpack.c.0.s8 %v161
    %v163 = vlaneseq
    %v164 = vshrl.u32 %v163, 7
    %v165 = vsub.s32 %v162, %v164
    %v166 = vrot.slane %v138, %v165
    %v167 = vcombine.low %v145, %v159
    %v168 = vcombine.high %v145, %v159
    %v169 = vcombine.low %v152, %v166
    %v177 = vpack.c.bf16 %v131, %v131
    %v178 = vpack.c.bf16 %v132, %v132
    %v179 = vpack.c.bf16 %v133, %v133
    %v180 = vpack.c.bf16 %v134, %v134
    %v181 = vpack.c.bf16 %v167, %v167
    %v182 = vpack.c.bf16 %v168, %v168
    %v183 = vpack.c.bf16 %v169, %v169
    %v184 = vld [vmem:[#allocation5] sm:$0xf]
    %v185 = vld [vmem:[#allocation5 + $0x4] sm:$0xf]
    %v186 = vld [vmem:[#allocation5 + $0x8] sm:$0xf]
    %v187 = vld [vmem:[#allocation5 + $0xc] sm:$0xf]
    %v188 = vld [vmem:[#allocation5 + $0x10] sm:$0xf]
    %v189 = vld [vmem:[#allocation5 + $0x14] sm:$0xf]
    %v190 = vld [vmem:[#allocation5 + $0x18] sm:$0xf]
    %v191 = vld [vmem:[#allocation5 + $0x1c] sm:$0xf]
    %v192 = vld [vmem:[#allocation5 + $0x20] sm:$0xf]
    %v193 = vld [vmem:[#allocation5 + $0x24] sm:$0xf]
    %v194 = vld [vmem:[#allocation5 + $0x28] sm:$0xf]
    %v195 = vld [vmem:[#allocation5 + $0x2c] sm:$0xf]
    %v196 = vld [vmem:[#allocation5 + $0x30] sm:$0xf]
    %v197 = vld [vmem:[#allocation5 + $0x34] sm:$0xf]
    %v198 = vld [vmem:[#allocation5 + $0x38] sm:$0xf]
    %v199 = vld [vmem:[#allocation5 + $0x3c] sm:$0xf]
    %v200 = vld [vmem:[#allocation5 + $0x40] sm:$0xf]
    %v201 = vld [vmem:[#allocation5 + $0x44] sm:$0xf]
    %v202 = vld [vmem:[#allocation5 + $0x48] sm:$0xf]
    %v203 = vld [vmem:[#allocation5 + $0x4c] sm:$0xf]
    %v204 = vld [vmem:[#allocation5 + $0x50] sm:$0xf]
    %v205 = vld [vmem:[#allocation5 + $0x54] sm:$0xf]
    %v206 = vld [vmem:[#allocation5 + $0x58] sm:$0xf]
    %v207 = vld [vmem:[#allocation5 + $0x5c] sm:$0xf]
    %v208 = vld [vmem:[#allocation5 + $0x60] sm:$0xf]
    %v209 = vld [vmem:[#allocation5 + $0x64] sm:$0xf]
    %v210 = vld [vmem:[#allocation5 + $0x68] sm:$0xf]
    %v211 = vld [vmem:[#allocation5 + $0x6c] sm:$0xf]
    %v212 = vld [vmem:[#allocation5 + $0x70] sm:$0xf]
    %v213 = vld [vmem:[#allocation5 + $0x74] sm:$0xf]
    %v214 = vld [vmem:[#allocation5 + $0x78] sm:$0xf]
    %v215 = vld [vmem:[#allocation5 + $0x7c] sm:$0xf]
    %v216 = vld [vmem:[#allocation5 + $0x80] sm:$0xf]
    %v217 = vld [vmem:[#allocation5 + $0x84] sm:$0xf]
    %v218 = vld [vmem:[#allocation5 + $0x88] sm:$0xf]
    %v219 = vld [vmem:[#allocation5 + $0x8c] sm:$0xf]
    %v220 = vld [vmem:[#allocation5 + $0x90] sm:$0xf]
    %v221 = vld [vmem:[#allocation5 + $0x94] sm:$0xf]
    %v222 = vld [vmem:[#allocation5 + $0x98] sm:$0xf]
    %v223 = vld [vmem:[#allocation5 + $0x9c] sm:$0xf]
    %v224 = vld [vmem:[#allocation5 + $0xa0] sm:$0xf]
    %v225 = vld [vmem:[#allocation5 + $0xa4] sm:$0xf]
    %v226 = vld [vmem:[#allocation5 + $0xa8] sm:$0xf]
    %v227 = vld [vmem:[#allocation5 + $0xac] sm:$0xf]
    %v228 = vld [vmem:[#allocation5 + $0xb0] sm:$0xf]
    %v229 = vld [vmem:[#allocation5 + $0xb4] sm:$0xf]
    %v230 = vld [vmem:[#allocation5 + $0xb8] sm:$0xf]
    %v231 = vld [vmem:[#allocation5 + $0xbc] sm:$0xf]
    %v232 = vld [vmem:[#allocation5 + $0xc0] sm:$0xf]
    %v233 = vld [vmem:[#allocation5 + $0xc4] sm:$0xf]
    %v234 = vld [vmem:[#allocation5 + $0xc8] sm:$0xf]
    %v235 = vld [vmem:[#allocation5 + $0xcc] sm:$0xf]
    %v236 = vld [vmem:[#allocation5 + $0xd0] sm:$0xf]
    %v237 = vld [vmem:[#allocation5 + $0xd4] sm:$0xf]
    %v238 = vld [vmem:[#allocation5 + $0xd8] sm:$0xf]
    %v239 = vld [vmem:[#allocation5 + $0xdc] sm:$0xf]
    %v240 = vld [vmem:[#allocation5 + $0xe0] sm:$0xf]
    %v241 = vld [vmem:[#allocation5 + $0xe4] sm:$0xf]
    %v242 = vld [vmem:[#allocation5 + $0xe8] sm:$0xf]
    %v243 = vld [vmem:[#allocation5 + $0xec] sm:$0xf]
    %v244 = vld [vmem:[#allocation5 + $0xf0] sm:$0xf]
    %v245 = vld [vmem:[#allocation5 + $0xf4] sm:$0xf]
    %v246 = vld [vmem:[#allocation5 + $0xf8] sm:$0xf]
    %v247 = vld [vmem:[#allocation5 + $0xfc] sm:$0xf]
    %v248 = vld [vmem:[#allocation5 + $0x100] sm:$0xf]
    %v249 = vld [vmem:[#allocation5 + $0x104] sm:$0xf]
    %v250 = vld [vmem:[#allocation5 + $0x108] sm:$0xf]
    %v251 = vld [vmem:[#allocation5 + $0x10c] sm:$0xf]
    %v252 = vld [vmem:[#allocation5 + $0x110] sm:$0xf]
    %v253 = vld [vmem:[#allocation5 + $0x114] sm:$0xf]
    %v254 = vld [vmem:[#allocation5 + $0x118] sm:$0xf]
    %v255 = vld [vmem:[#allocation5 + $0x11c] sm:$0xf]
    %v256 = vld [vmem:[#allocation5 + $0x120] sm:$0xf]
    %v257 = vld [vmem:[#allocation5 + $0x124] sm:$0xf]
    %v258 = vld [vmem:[#allocation5 + $0x128] sm:$0xf]
    %v259 = vld [vmem:[#allocation5 + $0x12c] sm:$0xf]
    %v260 = vld [vmem:[#allocation5 + $0x130] sm:$0xf]
    %v261 = vld [vmem:[#allocation5 + $0x134] sm:$0xf]
    %v262 = vld [vmem:[#allocation5 + $0x138] sm:$0xf]
    %v263 = vld [vmem:[#allocation5 + $0x13c] sm:$0xf]
    %v264 = vld [vmem:[#allocation5 + $0x140] sm:$0xf]
    %v265 = vld [vmem:[#allocation5 + $0x144] sm:$0xf]
    %v266 = vld [vmem:[#allocation5 + $0x148] sm:$0xf]
    %v267 = vld [vmem:[#allocation5 + $0x14c] sm:$0xf]
    %v268 = vld [vmem:[#allocation5 + $0x150] sm:$0xf]
    %v269 = vld [vmem:[#allocation5 + $0x154] sm:$0xf]
    %v270 = vld [vmem:[#allocation5 + $0x158] sm:$0xf]
    %v271 = vld [vmem:[#allocation5 + $0x15c] sm:$0xf]
    %v272 = vld [vmem:[#allocation5 + $0x160] sm:$0xf]
    %v273 = vld [vmem:[#allocation5 + $0x164] sm:$0xf]
    %v274 = vld [vmem:[#allocation5 + $0x168] sm:$0xf]
    %v275 = vld [vmem:[#allocation5 + $0x16c] sm:$0xf]
    %v276 = vld [vmem:[#allocation5 + $0x170] sm:$0xf]
    %v277 = vld [vmem:[#allocation5 + $0x174] sm:$0xf]
    %v278 = vld [vmem:[#allocation5 + $0x178] sm:$0xf]
    %v279 = vld [vmem:[#allocation5 + $0x17c] sm:$0xf]
    %v280 = vld [vmem:[#allocation5 + $0x180] sm:$0xf]
    %v281 = vld [vmem:[#allocation5 + $0x184] sm:$0xf]
    %v282 = vld [vmem:[%s2] sm:$0x1]
    %v284 = vlaneseq
    %v285 = vshrl.u32 %v284, 7
    %v286 = vsub.s32 0, %v285
    %v287 = vrot.slane %v282, %v286
    %v387 = vunpack.c.l.b16 %v184
    %v388 = vunpack.c.l.b16 %v185
    %v389 = vunpack.c.l.b16 %v186
    %v390 = vunpack.c.l.b16 %v187
    %v391 = vunpack.c.l.b16 %v188
    %v392 = vunpack.c.l.b16 %v189
    %v393 = vunpack.c.l.b16 %v190
    %v394 = vunpack.c.l.b16 %v191
    %v395 = vunpack.c.l.b16 %v192
    %v396 = vunpack.c.l.b16 %v193
    %v397 = vunpack.c.l.b16 %v194
    %v398 = vunpack.c.l.b16 %v195
    %v399 = vunpack.c.l.b16 %v196
    %v400 = vunpack.c.l.b16 %v197
    %v401 = vunpack.c.l.b16 %v198
    %v402 = vunpack.c.l.b16 %v199
    %v403 = vunpack.c.l.b16 %v200
    %v404 = vunpack.c.l.b16 %v201
    %v405 = vunpack.c.l.b16 %v202
    %v406 = vunpack.c.l.b16 %v203
    %v407 = vunpack.c.l.b16 %v204
    %v408 = vunpack.c.l.b16 %v205
    %v409 = vunpack.c.l.b16 %v206
    %v410 = vunpack.c.l.b16 %v207
    %v411 = vunpack.c.l.b16 %v208
    %v412 = vunpack.c.l.b16 %v209
    %v413 = vunpack.c.l.b16 %v210
    %v414 = vunpack.c.l.b16 %v211
    %v415 = vunpack.c.l.b16 %v212
    %v416 = vunpack.c.l.b16 %v213
    %v417 = vunpack.c.l.b16 %v214
    %v418 = vunpack.c.l.b16 %v215
    %v419 = vunpack.c.l.b16 %v216
    %v420 = vunpack.c.l.b16 %v217
    %v421 = vunpack.c.l.b16 %v218
    %v422 = vunpack.c.l.b16 %v219
    %v423 = vunpack.c.l.b16 %v220
    %v424 = vunpack.c.l.b16 %v221
    %v425 = vunpack.c.l.b16 %v222
    %v426 = vunpack.c.l.b16 %v223
    %v427 = vunpack.c.l.b16 %v224
    %v428 = vunpack.c.l.b16 %v225
    %v429 = vunpack.c.l.b16 %v226
    %v430 = vunpack.c.l.b16 %v227
    %v431 = vunpack.c.l.b16 %v228
    %v432 = vunpack.c.l.b16 %v229
    %v433 = vunpack.c.l.b16 %v230
    %v434 = vunpack.c.l.b16 %v231
    %v435 = vunpack.c.l.b16 %v232
    %v436 = vunpack.c.l.b16 %v233
    %v437 = vunpack.c.l.b16 %v234
    %v438 = vunpack.c.l.b16 %v235
    %v439 = vunpack.c.l.b16 %v236
    %v440 = vunpack.c.l.b16 %v237
    %v441 = vunpack.c.l.b16 %v238
    %v442 = vunpack.c.l.b16 %v239
    %v443 = vunpack.c.l.b16 %v240
    %v444 = vunpack.c.l.b16 %v241
    %v445 = vunpack.c.l.b16 %v242
    %v446 = vunpack.c.l.b16 %v243
    %v447 = vunpack.c.l.b16 %v244
    %v448 = vunpack.c.l.b16 %v245
    %v449 = vunpack.c.l.b16 %v246
    %v450 = vunpack.c.l.b16 %v247
    %v451 = vunpack.c.l.b16 %v248
    %v452 = vunpack.c.l.b16 %v249
    %v453 = vunpack.c.l.b16 %v250
    %v454 = vunpack.c.l.b16 %v251
    %v455 = vunpack.c.l.b16 %v252
    %v456 = vunpack.c.l.b16 %v253
    %v457 = vunpack.c.l.b16 %v254
    %v458 = vunpack.c.l.b16 %v255
    %v459 = vunpack.c.l.b16 %v256
    %v460 = vunpack.c.l.b16 %v257
    %v461 = vunpack.c.l.b16 %v258
    %v462 = vunpack.c.l.b16 %v259
    %v463 = vunpack.c.l.b16 %v260
    %v464 = vunpack.c.l.b16 %v261
    %v465 = vunpack.c.l.b16 %v262
    %v466 = vunpack.c.l.b16 %v263
    %v467 = vunpack.c.l.b16 %v264
    %v468 = vunpack.c.l.b16 %v265
    %v469 = vunpack.c.l.b16 %v266
    %v470 = vunpack.c.l.b16 %v267
    %v471 = vunpack.c.l.b16 %v268
    %v472 = vunpack.c.l.b16 %v269
    %v473 = vunpack.c.l.b16 %v270
    %v474 = vunpack.c.l.b16 %v271
    %v475 = vunpack.c.l.b16 %v272
    %v476 = vunpack.c.l.b16 %v273
    %v477 = vunpack.c.l.b16 %v274
    %v478 = vunpack.c.l.b16 %v275
    %v479 = vunpack.c.l.b16 %v276
    %v480 = vunpack.c.l.b16 %v277
    %v481 = vunpack.c.l.b16 %v278
    %v482 = vunpack.c.l.b16 %v279
    %v483 = vunpack.c.l.b16 %v280
    %v484 = vunpack.c.l.b16 %v281
    %v485 = vpack.c.b16 %v388, %v387
    %v486 = vpack.c.b16 %v390, %v389
    %v487 = vpack.c.b16 %v392, %v391
    %v488 = vpack.c.b16 %v394, %v393
    %v489 = vpack.c.b16 %v396, %v395
    %v490 = vpack.c.b16 %v398, %v397
    %v491 = vpack.c.b16 %v400, %v399
    %v492 = vpack.c.b16 %v402, %v401
    %v493 = vpack.c.b16 %v404, %v403
    %v494 = vpack.c.b16 %v406, %v405
    %v495 = vpack.c.b16 %v408, %v407
    %v496 = vpack.c.b16 %v410, %v409
    %v497 = vpack.c.b16 %v412, %v411
    %v498 = vpack.c.b16 %v414, %v413
    %v499 = vpack.c.b16 %v416, %v415
    %v500 = vpack.c.b16 %v418, %v417
    %v501 = vpack.c.b16 %v420, %v419
    %v502 = vpack.c.b16 %v422, %v421
    %v503 = vpack.c.b16 %v424, %v423
    %v504 = vpack.c.b16 %v426, %v425
    %v505 = vpack.c.b16 %v428, %v427
    %v506 = vpack.c.b16 %v430, %v429
    %v507 = vpack.c.b16 %v432, %v431
    %v508 = vpack.c.b16 %v434, %v433
    %v509 = vpack.c.b16 %v436, %v435
    %v510 = vpack.c.b16 %v438, %v437
    %v511 = vpack.c.b16 %v440, %v439
    %v512 = vpack.c.b16 %v442, %v441
    %v513 = vpack.c.b16 %v444, %v443
    %v514 = vpack.c.b16 %v446, %v445
    %v515 = vpack.c.b16 %v448, %v447
    %v516 = vpack.c.b16 %v450, %v449
    %v517 = vpack.c.b16 %v452, %v451
    %v518 = vpack.c.b16 %v454, %v453
    %v519 = vpack.c.b16 %v456, %v455
    %v520 = vpack.c.b16 %v458, %v457
    %v521 = vpack.c.b16 %v460, %v459
    %v522 = vpack.c.b16 %v462, %v461
    %v523 = vpack.c.b16 %v464, %v463
    %v524 = vpack.c.b16 %v466, %v465
    %v525 = vpack.c.b16 %v468, %v467
    %v526 = vpack.c.b16 %v470, %v469
    %v527 = vpack.c.b16 %v472, %v471
    %v528 = vpack.c.b16 %v474, %v473
    %v529 = vpack.c.b16 %v476, %v475
    %v530 = vpack.c.b16 %v478, %v477
    %v531 = vpack.c.b16 %v480, %v479
    %v532 = vpack.c.b16 %v482, %v481
    %v533 = vpack.c.b16 %v484, %v483
    %vm583 = vcmask 130048
    %v585 = vsel %vm583, %v183, 0
    %587 = vmatprep.subr.bf16.mxu0 0
    %588 = vmatpush1.bf16.msra.mxu0 %v485
    %589 = vmatprep.subr.bf16.mxu0 0
    %590 = vmatpush1.bf16.msra.mxu0 %v486
    %591 = vmatprep.subr.bf16.mxu0 0
    %592 = vmatpush1.bf16.msra.mxu0 %v487
    %593 = vmatprep.subr.bf16.mxu0 0
    %594 = vmatpush1.bf16.msra.mxu0 %v488
    %595 = vmatprep.subr.bf16.mxu0 0
    %596 = vmatpush1.bf16.msra.mxu0 %v489
    %597 = vmatprep.subr.bf16.mxu0 0
    %598 = vmatpush1.bf16.msra.mxu0 %v490
    %599 = vmatprep.subr.bf16.mxu0 0
    %600 = vmatpush1.bf16.msra.mxu0 %v491
    %601 = vmatprep.subr.bf16.mxu0 0
    %602 = vmatpush1.bf16.msra.mxu0 %v492
    %603 = vmatprep.subr.bf16.mxu0 0
    %604 = vmatpush1.bf16.msra.mxu0 %v493
    %605 = vmatprep.subr.bf16.mxu0 0
    %606 = vmatpush1.bf16.msra.mxu0 %v494
    %607 = vmatprep.subr.bf16.mxu0 0
    %608 = vmatpush1.bf16.msra.mxu0 %v495
    %609 = vmatprep.subr.bf16.mxu0 0
    %610 = vmatpush1.bf16.msra.mxu0 %v496
    %611 = vmatprep.subr.bf16.mxu0 0
    %612 = vmatpush1.bf16.msra.mxu0 %v497
    %613 = vmatprep.subr.bf16.mxu0 0
    %614 = vmatpush1.bf16.msra.mxu0 %v498
    %615 = vmatprep.subr.bf16.mxu0 0
    %616 = vmatpush1.bf16.msra.mxu0 %v499
    %617 = vmatprep.subr.bf16.mxu0 0
    %618 = vmatpush1.bf16.msra.mxu0 %v500
    %619 = vmatprep.mubr.bf16.mxu0 %v178
    %620 = vmatmul.mubr.bf16.gmra.mrb[0].mxu0 %v177
    %v621 = vpop.f32.mrb[0].mxu0
    %v622 = vadd.f32 %v287, %v621
    %v623 = vpop.f32.mrb[0].mxu0
    %v624 = vpop.f32.mrb[0].mxu0
    %v625 = vpop.f32.mrb[0].mxu0
    %626 = vdwg.mxu0
    %627 = vmatprep.subr.bf16.mxu0 0
    %628 = vmatpush1.bf16.msra.mxu0 %v501
    %629 = vmatprep.subr.bf16.mxu0 0
    %630 = vmatpush1.bf16.msra.mxu0 %v502
    %631 = vmatprep.subr.bf16.mxu0 0
    %632 = vmatpush1.bf16.msra.mxu0 %v503
    %633 = vmatprep.subr.bf16.mxu0 0
    %634 = vmatpush1.bf16.msra.mxu0 %v504
    %635 = vmatprep.subr.bf16.mxu0 0
    %636 = vmatpush1.bf16.msra.mxu0 %v505
    %637 = vmatprep.subr.bf16.mxu0 0
    %638 = vmatpush1.bf16.msra.mxu0 %v506
    %639 = vmatprep.subr.bf16.mxu0 0
    %640 = vmatpush1.bf16.msra.mxu0 %v507
    %641 = vmatprep.subr.bf16.mxu0 0
    %642 = vmatpush1.bf16.msra.mxu0 %v508
    %643 = vmatprep.subr.bf16.mxu0 0
    %644 = vmatpush1.bf16.msra.mxu0 %v509
    %645 = vmatprep.subr.bf16.mxu0 0
    %646 = vmatpush1.bf16.msra.mxu0 %v510
    %647 = vmatprep.subr.bf16.mxu0 0
    %648 = vmatpush1.bf16.msra.mxu0 %v511
    %649 = vmatprep.subr.bf16.mxu0 0
    %650 = vmatpush1.bf16.msra.mxu0 %v512
    %651 = vmatprep.subr.bf16.mxu0 0
    %652 = vmatpush1.bf16.msra.mxu0 %v513
    %653 = vmatprep.subr.bf16.mxu0 0
    %654 = vmatpush1.bf16.msra.mxu0 %v514
    %655 = vmatprep.subr.bf16.mxu0 0
    %656 = vmatpush1.bf16.msra.mxu0 %v515
    %657 = vmatprep.subr.bf16.mxu0 0
    %658 = vmatpush1.bf16.msra.mxu0 %v516
    %659 = vmatprep.mubr.bf16.mxu0 %v180
    %660 = vmatmul.mubr.bf16.gmra.mrb[0].mxu0 %v179
    %v661 = vpop.f32.mrb[0].mxu0
    %v662 = vadd.f32 %v622, %v661
    %v663 = vpop.f32.mrb[0].mxu0
    %v664 = vpop.f32.mrb[0].mxu0
    %v665 = vpop.f32.mrb[0].mxu0
    %666 = vdwg.mxu0
    %667 = vmatprep.subr.bf16.mxu0 0
    %668 = vmatpush1.bf16.msra.mxu0 %v517
    %669 = vmatprep.subr.bf16.mxu0 0
    %670 = vmatpush1.bf16.msra.mxu0 %v518
    %671 = vmatprep.subr.bf16.mxu0 0
    %672 = vmatpush1.bf16.msra.mxu0 %v519
    %673 = vmatprep.subr.bf16.mxu0 0
    %674 = vmatpush1.bf16.msra.mxu0 %v520
    %675 = vmatprep.subr.bf16.mxu0 0
    %676 = vmatpush1.bf16.msra.mxu0 %v521
    %677 = vmatprep.subr.bf16.mxu0 0
    %678 = vmatpush1.bf16.msra.mxu0 %v522
    %679 = vmatprep.subr.bf16.mxu0 0
    %680 = vmatpush1.bf16.msra.mxu0 %v523
    %681 = vmatprep.subr.bf16.mxu0 0
    %682 = vmatpush1.bf16.msra.mxu0 %v524
    %683 = vmatprep.subr.bf16.mxu0 0
    %684 = vmatpush1.bf16.msra.mxu0 %v525
    %685 = vmatprep.subr.bf16.mxu0 0
    %686 = vmatpush1.bf16.msra.mxu0 %v526
    %687 = vmatprep.subr.bf16.mxu0 0
    %688 = vmatpush1.bf16.msra.mxu0 %v527
    %689 = vmatprep.subr.bf16.mxu0 0
    %690 = vmatpush1.bf16.msra.mxu0 %v528
    %691 = vmatprep.subr.bf16.mxu0 0
    %692 = vmatpush1.bf16.msra.mxu0 %v529
    %693 = vmatprep.subr.bf16.mxu0 0
    %694 = vmatpush1.bf16.msra.mxu0 %v530
    %695 = vmatprep.subr.bf16.mxu0 0
    %696 = vmatpush1.bf16.msra.mxu0 %v531
    %697 = vmatprep.subr.bf16.mxu0 0
    %698 = vmatpush1.bf16.msra.mxu0 %v532
    %699 = vmatprep.mubr.bf16.mxu0 %v182
    %700 = vmatmul.mubr.bf16.gmra.mrb[0].mxu0 %v181
    %v701 = vpop.f32.mrb[0].mxu0
    %v702 = vadd.f32 %v662, %v701
    %v703 = vpop.f32.mrb[0].mxu0
    %v704 = vpop.f32.mrb[0].mxu0
    %v705 = vpop.f32.mrb[0].mxu0
    %706 = vdwg.mxu0
    %707 = vmatprep.subr.bf16.mxu0 0
    %708 = vmatpush1.bf16.msra.mxu0 %v533
    %709 = vmatprep.subr.bf16.mxu0 0
    %710 = vmatpush1.bf16.msra.mxu0 0
    %711 = vmatprep.subr.bf16.mxu0 0
    %712 = vmatpush1.bf16.msra.mxu0 0
    %713 = vmatprep.subr.bf16.mxu0 0
    %714 = vmatpush1.bf16.msra.mxu0 0
    %715 = vmatprep.subr.bf16.mxu0 0
    %716 = vmatpush1.bf16.msra.mxu0 0
    %717 = vmatprep.subr.bf16.mxu0 0
    %718 = vmatpush1.bf16.msra.mxu0 0
    %719 = vmatprep.subr.bf16.mxu0 0
    %720 = vmatpush1.bf16.msra.mxu0 0
    %721 = vmatprep.subr.bf16.mxu0 0
    %722 = vmatpush1.bf16.msra.mxu0 0
    %723 = vmatprep.subr.bf16.mxu0 0
    %724 = vmatpush1.bf16.msra.mxu0 0
    %725 = vmatprep.subr.bf16.mxu0 0
    %726 = vmatpush1.bf16.msra.mxu0 0
    %727 = vmatprep.subr.bf16.mxu0 0
    %728 = vmatpush1.bf16.msra.mxu0 0
    %729 = vmatprep.subr.bf16.mxu0 0
    %730 = vmatpush1.bf16.msra.mxu0 0
    %731 = vmatprep.subr.bf16.mxu0 0
    %732 = vmatpush1.bf16.msra.mxu0 0
    %733 = vmatprep.subr.bf16.mxu0 0
    %734 = vmatpush1.bf16.msra.mxu0 0
    %735 = vmatprep.subr.bf16.mxu0 0
    %736 = vmatpush1.bf16.msra.mxu0 0
    %737 = vmatprep.subr.bf16.mxu0 0
    %738 = vmatpush1.bf16.msra.mxu0 0
    %739 = vmatprep.mubr.bf16.mxu0 0
    %740 = vmatmul.mubr.bf16.gmra.mrb[0].mxu0 %v585
    %v741 = vpop.f32.mrb[0].mxu0
    %v742 = vadd.f32 %v702, %v741
    %v743 = vpop.f32.mrb[0].mxu0
    %v744 = vpop.f32.mrb[0].mxu0
    %v745 = vpop.f32.mrb[0].mxu0
    %746 = vdwg.mxu0
    %v747 = vmax.f32 %v742, 0.0
    %v748 = vpack.c.bf16 %v747, %v747
    %v749 = vld [vmem:[#allocation7] sm:$0xf]
    %v750 = vld [vmem:[#allocation7 + $0x4] sm:$0xf]
    %v751 = vld [vmem:[#allocation7 + $0x8] sm:$0xf]
    %v752 = vld [vmem:[#allocation7 + $0xc] sm:$0xf]
    %v753 = vld [vmem:[#allocation7 + $0x10] sm:$0xf]
    %v754 = vld [vmem:[#allocation7 + $0x14] sm:$0xf]
    %v755 = vld [vmem:[#allocation7 + $0x18] sm:$0xf]
    %v756 = vld [vmem:[#allocation7 + $0x1c] sm:$0xf]
    %v757 = vld [vmem:[#allocation7 + $0x20] sm:$0xf]
    %v758 = vld [vmem:[#allocation7 + $0x24] sm:$0xf]
    %v759 = vld [vmem:[#allocation7 + $0x28] sm:$0xf]
    %v760 = vld [vmem:[#allocation7 + $0x2c] sm:$0xf]
    %v761 = vld [vmem:[#allocation7 + $0x30] sm:$0xf]
    %v762 = vld [vmem:[#allocation7 + $0x34] sm:$0xf]
    %v763 = vld [vmem:[#allocation7 + $0x38] sm:$0xf]
    %v764 = vld [vmem:[#allocation7 + $0x3c] sm:$0xf]
    %v765 = vld [vmem:[%s4] sm:$0x1]
    %v767 = vlaneseq
    %v768 = vshrl.u32 %v767, 7
    %v769 = vsub.s32 0, %v768
    %v770 = vrot.slane %v765, %v769
    %v788 = vunpack.c.l.b16 %v749
    %v789 = vunpack.c.l.b16 %v750
    %v790 = vunpack.c.l.b16 %v751
    %v791 = vunpack.c.l.b16 %v752
    %v792 = vunpack.c.l.b16 %v753
    %v793 = vunpack.c.l.b16 %v754
    %v794 = vunpack.c.l.b16 %v755
    %v795 = vunpack.c.l.b16 %v756
    %v796 = vunpack.c.l.b16 %v757
    %v797 = vunpack.c.l.b16 %v758
    %v798 = vunpack.c.l.b16 %v759
    %v799 = vunpack.c.l.b16 %v760
    %v800 = vunpack.c.l.b16 %v761
    %v801 = vunpack.c.l.b16 %v762
    %v802 = vunpack.c.l.b16 %v763
    %v803 = vunpack.c.l.b16 %v764
    %v804 = vpack.c.b16 %v789, %v788
    %v805 = vpack.c.b16 %v791, %v790
    %v806 = vpack.c.b16 %v793, %v792
    %v807 = vpack.c.b16 %v795, %v794
    %v808 = vpack.c.b16 %v797, %v796
    %v809 = vpack.c.b16 %v799, %v798
    %v810 = vpack.c.b16 %v801, %v800
    %v811 = vpack.c.b16 %v803, %v802
    %820 = vmatprep.subr.bf16.mxu0 0
    %821 = vmatpush1.bf16.msra.mxu0 %v804
    %822 = vmatprep.subr.bf16.mxu0 0
    %823 = vmatpush1.bf16.msra.mxu0 %v805
    %824 = vmatprep.subr.bf16.mxu0 0
    %825 = vmatpush1.bf16.msra.mxu0 %v806
    %826 = vmatprep.subr.bf16.mxu0 0
    %827 = vmatpush1.bf16.msra.mxu0 %v807
    %828 = vmatprep.subr.bf16.mxu0 0
    %829 = vmatpush1.bf16.msra.mxu0 %v808
    %830 = vmatprep.subr.bf16.mxu0 0
    %831 = vmatpush1.bf16.msra.mxu0 %v809
    %832 = vmatprep.subr.bf16.mxu0 0
    %833 = vmatpush1.bf16.msra.mxu0 %v810
    %834 = vmatprep.subr.bf16.mxu0 0
    %835 = vmatpush1.bf16.msra.mxu0 %v811
    %836 = vmatprep.subr.bf16.mxu0 0
    %837 = vmatpush1.bf16.msra.mxu0 0
    %838 = vmatprep.subr.bf16.mxu0 0
    %839 = vmatpush1.bf16.msra.mxu0 0
    %840 = vmatprep.subr.bf16.mxu0 0
    %841 = vmatpush1.bf16.msra.mxu0 0
    %842 = vmatprep.subr.bf16.mxu0 0
    %843 = vmatpush1.bf16.msra.mxu0 0
    %844 = vmatprep.subr.bf16.mxu0 0
    %845 = vmatpush1.bf16.msra.mxu0 0
    %846 = vmatprep.subr.bf16.mxu0 0
    %847 = vmatpush1.bf16.msra.mxu0 0
    %848 = vmatprep.subr.bf16.mxu0 0
    %849 = vmatpush1.bf16.msra.mxu0 0
    %850 = vmatprep.subr.bf16.mxu0 0
    %851 = vmatpush1.bf16.msra.mxu0 0
    %852 = vmatprep.mubr.bf16.mxu0 0
    %853 = vmatmul.mubr.bf16.gmra.mrb[0].mxu0 %v748
    %v854 = vpop.f32.mrb[0].mxu0
    %v855 = vadd.f32 %v770, %v854
    %v856 = vpop.f32.mrb[0].mxu0
    %v857 = vpop.f32.mrb[0].mxu0
    %v858 = vpop.f32.mrb[0].mxu0
    %859 = vdwg.mxu0
    %v860 = vmax.f32 %v855, 0.0
    %v861 = vpack.c.bf16 %v860, %v860
    %v862 = vld [vmem:[#allocation8] sm:$0xf]
    %v863 = vld [vmem:[#allocation8 + $0x4] sm:$0xf]
    %v864 = vld [vmem:[#allocation8 + $0x8] sm:$0xf]
    %v865 = vld [vmem:[#allocation8 + $0xc] sm:$0xf]
    %v866 = vld [vmem:[#allocation8 + $0x10] sm:$0xf]
    %v867 = vld [vmem:[#allocation8 + $0x14] sm:$0xf]
    %v868 = vld [vmem:[#allocation8 + $0x18] sm:$0xf]
    %v869 = vld [vmem:[#allocation8 + $0x1c] sm:$0xf]
    %v870 = vld [vmem:[#allocation8 + $0x20] sm:$0xf]
    %v871 = vld [vmem:[#allocation8 + $0x24] sm:$0xf]
    %v872 = vld [vmem:[#allocation8 + $0x28] sm:$0xf]
    %v873 = vld [vmem:[#allocation8 + $0x2c] sm:$0xf]
    %v874 = vld [vmem:[#allocation8 + $0x30] sm:$0xf]
    %v875 = vld [vmem:[#allocation8 + $0x34] sm:$0xf]
    %v876 = vld [vmem:[#allocation8 + $0x38] sm:$0xf]
    %v877 = vld [vmem:[#allocation8 + $0x3c] sm:$0xf]
    %v878 = vld [vmem:[%s6] sm:$0x1]
    %v880 = vlaneseq
    %v881 = vshrl.u32 %v880, 7
    %v882 = vsub.s32 0, %v881
    %v883 = vrot.slane %v878, %v882
    %v901 = vunpack.c.l.b16 %v862
    %v902 = vunpack.c.l.b16 %v863
    %v903 = vunpack.c.l.b16 %v864
    %v904 = vunpack.c.l.b16 %v865
    %v905 = vunpack.c.l.b16 %v866
    %v906 = vunpack.c.l.b16 %v867
    %v907 = vunpack.c.l.b16 %v868
    %v908 = vunpack.c.l.b16 %v869
    %v909 = vunpack.c.l.b16 %v870
    %v910 = vunpack.c.l.b16 %v871
    %v911 = vunpack.c.l.b16 %v872
    %v912 = vunpack.c.l.b16 %v873
    %v913 = vunpack.c.l.b16 %v874
    %v914 = vunpack.c.l.b16 %v875
    %v915 = vunpack.c.l.b16 %v876
    %v916 = vunpack.c.l.b16 %v877
    %v917 = vpack.c.b16 %v902, %v901
    %v918 = vpack.c.b16 %v904, %v903
    %v919 = vpack.c.b16 %v906, %v905
    %v920 = vpack.c.b16 %v908, %v907
    %v921 = vpack.c.b16 %v910, %v909
    %v922 = vpack.c.b16 %v912, %v911
    %v923 = vpack.c.b16 %v914, %v913
    %v924 = vpack.c.b16 %v916, %v915
    %933 = vmatprep.subr.bf16.mxu0 0
    %934 = vmatpush1.bf16.msra.mxu0 %v917
    %935 = vmatprep.subr.bf16.mxu0 0
    %936 = vmatpush1.bf16.msra.mxu0 %v918
    %937 = vmatprep.subr.bf16.mxu0 0
    %938 = vmatpush1.bf16.msra.mxu0 %v919
    %939 = vmatprep.subr.bf16.mxu0 0
    %940 = vmatpush1.bf16.msra.mxu0 %v920
    %941 = vmatprep.subr.bf16.mxu0 0
    %942 = vmatpush1.bf16.msra.mxu0 %v921
    %943 = vmatprep.subr.bf16.mxu0 0
    %944 = vmatpush1.bf16.msra.mxu0 %v922
    %945 = vmatprep.subr.bf16.mxu0 0
    %946 = vmatpush1.bf16.msra.mxu0 %v923
    %947 = vmatprep.subr.bf16.mxu0 0
    %948 = vmatpush1.bf16.msra.mxu0 %v924
    %949 = vmatprep.subr.bf16.mxu0 0
    %950 = vmatpush1.bf16.msra.mxu0 0
    %951 = vmatprep.subr.bf16.mxu0 0
    %952 = vmatpush1.bf16.msra.mxu0 0
    %953 = vmatprep.subr.bf16.mxu0 0
    %954 = vmatpush1.bf16.msra.mxu0 0
    %955 = vmatprep.subr.bf16.mxu0 0
    %956 = vmatpush1.bf16.msra.mxu0 0
    %957 = vmatprep.subr.bf16.mxu0 0
    %958 = vmatpush1.bf16.msra.mxu0 0
    %959 = vmatprep.subr.bf16.mxu0 0
    %960 = vmatpush1.bf16.msra.mxu0 0
    %961 = vmatprep.subr.bf16.mxu0 0
    %962 = vmatpush1.bf16.msra.mxu0 0
    %963 = vmatprep.subr.bf16.mxu0 0
    %964 = vmatpush1.bf16.msra.mxu0 0
    %965 = vmatprep.mubr.bf16.mxu0 0
    %966 = vmatmul.mubr.bf16.gmra.mrb[0].mxu0 %v861
    %v967 = vpop.f32.mrb[0].mxu0
    %v968 = vadd.f32 %v883, %v967
    %v969 = vpop.f32.mrb[0].mxu0
    %v970 = vpop.f32.mrb[0].mxu0
    %v971 = vpop.f32.mrb[0].mxu0
    %972 = vdwg.mxu0
    %v973 = vpack.c.bf16 %v968, %v968
    %v976 = vunpack.c.l.s4 1966171168
    %v977 = vunpack.c.0.s8 %v976
    %v978 = vlaneseq
    %v979 = vshrl.u32 %v978, 7
    %v980 = vsub.s32 %v977, %v979
    %v981 = vrot.slane %v973, %v980
    %v982 = vcombine.high %v981, %v981
    %v984 = vunpack.c.l.s4 1966171168
    %v985 = vunpack.c.0.s8 %v984
    %v986 = vlaneseq
    %v987 = vshrl.u32 %v986, 7
    %v988 = vsub.s32 %v985, %v987
    %v989 = vrot.slane %v981, %v988
    %v991 = vunpack.c.l.s4 1966171168
    %v992 = vunpack.c.0.s8 %v991
    %v993 = vlaneseq
    %v994 = vshrl.u32 %v993, 7
    %v995 = vsub.s32 %v992, %v994
    %v996 = vrot.slane %v982, %v995
    %v997 = vcombine.high %v989, %v989
    %v998 = vcombine.high %v996, %v996
    %1003 = vst [vmem:[#allocation10] sm:$0x1] %v989
    %1004 = vst [vmem:[#allocation10 + $0x1] sm:$0x1] %v996
    %1005 = vst [vmem:[#allocation10 + $0x2] sm:$0x1] %v997
    %1006 = vst [vmem:[#allocation10 + $0x3] sm:$0x1] %v998
    // Predicated region
    $region46: #{tpu_custom_call.1} parent=1 // pred_check
      _
    $region47: #{tpu_custom_call.1} parent=1 // pred_check_branch
      %1008 = sbr.rel (0) target = $region49
    $region48: #{tpu_custom_call.1} parent=1 // pred_region
      %s1010 = ssub.s32 64, 16
      %1011 = vsyncadd [#allocation4], %s1010
      %s1012 = sshll.u32 [#allocation10], 4
      %s1013 = int_to_ptr.vmem [resolvable:$true] %s1012
      %1018 = dma.vmem_to_hbm [thread:$0]  %s1013, 16, %s7, [#allocation4], 16, 16, 1
    $region49: #{tpu_custom_call.1} parent=1 // pred_fallthru
      _
    // Predicated region
    $region50: #{tpu_custom_call.1} parent=1 // pred_check
      _
    $region51: #{tpu_custom_call.1} parent=1 // pred_check_branch
      %1020 = sbr.rel (0) target = $region53
    $region52: #{tpu_custom_call.1} parent=1 // pred_region
      %1021 = dma.done [#allocation4], 64
    $region53: #{tpu_custom_call.1} parent=1 // pred_fallthru
      _
    %1022 = vsyncpa [#allocation3], 1
    %1023 = vsyncpa [#allocation6], 1
    %1024 = vsyncpa [#allocation9], 1
    %1025 = vsyncpa [#allocation4], 1

</llo_original>
